<compile_context>
chip_gen: v5e
topology: v5e:2x2
jax: 0.10.0
libtpu: 0.0.40
codegen_flags: <defaults>
</compile_context>

<pallas_src>
import functools

import jax
import jax.numpy as jnp
import numpy as np
from jax.experimental import pallas as pl
from jax.experimental.pallas import tpu as pltpu

IN_FEATURES = 128
OUT_FEATURES = 2
DEFAULT_TILE_B = 2048            # 1 MiB x block per grid step
_VMEM_LIMIT = 32 * 1024 * 1024   # explicit scoped-VMEM cap, safe on v5e/v6e/v7x


def _round_up(n, m):
    return ((n + m - 1) // m) * m


# --------------------------------------------------------------------------
# Kernels
# --------------------------------------------------------------------------
def _loss_fa_kernel(w8_ref, b8_ref, x_ref, y_ref, rows_ref, part_ref, *,
                    tile_b, inv_r, n_valid):
    i = pl.program_id(0)

    # One fused MXU dot: rows of W8 are [w0, w1, w1-w0, 0...]; contracting the
    # feature axis of both operands gives a lane-dense (8, tile_b) result with
    # the batch on the 128-lane axis (no transpose of the big x array).
    z = jax.lax.dot_general(
        w8_ref[...], x_ref[...],
        dimension_numbers=(((1,), (1,)), ((), ())),
        preferred_element_type=jnp.float32) + b8_ref[...]          # (8, tile_b)

    d = z[2:3, :]                                                  # z1 - z0
    u = d * inv_r                                                  # (z1-z0)/r

    # Single EUP pass: stack both exp arguments into one (2, tile_b) operand.
    e = jnp.exp(jnp.concatenate([-d, -jnp.abs(u)], axis=0))        # (2, tile_b)
    s1 = 1.0 / (1.0 + e[0:1, :])              # sigmoid(d)   == softmax(z)[:,1]
    sp_pos = jnp.maximum(u, 0.0) + jnp.log(1.0 + e[1:2, :])        # softplus(u)
    sp_neg = sp_pos - u                                            # softplus(-u)

    # round-half-even(softmax(z)[:,1]) == (d > 0)  (d == 0 -> 0.5 -> 0).
    pred = (d > 0.0).astype(jnp.float32)                           # (1, tile_b)

    # Consolidated lane-dense per-row output block:
    #   rows 0-1 logits, rows 2-3 predScore, row 4 predLabel, rows 5-7 unused.
    rows_ref[0:2, :] = z[0:2, :]
    rows_ref[2:3, :] = 1.0 - s1
    rows_ref[3:4, :] = s1
    rows_ref[4:5, :] = pred
    rows_ref[5:8, :] = jnp.zeros((3, tile_b), jnp.float32)

    # Temperature-scaled BCE with torch's log clamp (log >= -100).
    y = y_ref[...]                                                 # (1, tile_b)
    log_p = jnp.maximum(-sp_neg, -100.0)      # log(sigmoid(u))   = log(p1)
    log_1mp = jnp.maximum(-sp_pos, -100.0)    # log(1-sigmoid(u)) = log(1-p1)
    bce = -(y * log_p + (1.0 - y) * log_1mp)                       # (1, tile_b)

    # Ragged-tail masking via select (NaN-safe: the un-padded OOB lanes of the
    # last tile contain unspecified VMEM data).
    gid = jax.lax.broadcasted_iota(jnp.int32, (1, tile_b), 1) + i * tile_b
    valid = gid < n_valid
    hit = (pred == y).astype(jnp.float32)
    bce_sum = jnp.sum(jnp.where(valid, bce, 0.0), axis=1, keepdims=True)  # (1,1)
    cor_sum = jnp.sum(jnp.where(valid, hit, 0.0), axis=1, keepdims=True)  # (1,1)

    # Per-tile partial sums (no cross-grid carry -> grid axis stays parallel).
    # Row 0 = bce partial sum, row 1 = correct-count partial sum.
    both = jnp.concatenate([bce_sum, cor_sum], axis=0)             # (2, 1)
    part_ref[...] = jnp.broadcast_to(both, (2, 128))


def _score_kernel(b1_ref, w8_ref, x_ref, out_ref):
    # Slim inference path: only column 1 of the logits (w1 . x + b1).
    z = jax.lax.dot_general(
        w8_ref[...], x_ref[...],
        dimension_numbers=(((1,), (1,)), ((), ())),
        preferred_element_type=jnp.float32)                        # (8, tile_b)
    out_ref[...] = z[1:2, :] + b1_ref[0]                           # (1, tile_b)


# --------------------------------------------------------------------------
# Wrapper (mirrors lossFA.forward)
# --------------------------------------------------------------------------
def loss_fa_forward(x, weight, bias, labels=None, r=1.0, tile_b=DEFAULT_TILE_B):
    """Mirrors lossFA.forward.

    x:      (B, 1, 128) float32  (squeezed on axis 1, as in torch)
    weight: (2, 128) float32     (torch nn.Linear(128, 2) layout: out, in)
    bias:   (2,) float32
    labels: (B,) int/float or None
    r:      python scalar temperature
    """
    x2d = jnp.squeeze(x, axis=1).astype(jnp.float32)               # (B, 128)
    batch = x2d.shape[0]

    tile_b = _round_up(max(1, min(tile_b, batch)), 128)
    num_tiles = pl.cdiv(batch, tile_b)

    w = weight.astype(jnp.float32)                                 # (2, 128)
    b = bias.astype(jnp.float32)                                   # (2,)

    # Fused weight operand: rows [w0, w1, w1-w0, 0...] -> one MXU dot feeds
    # both the logits output and the loss path.
    w8 = jnp.zeros((8, IN_FEATURES), jnp.float32)
    w8 = w8.at[0].set(w[0]).at[1].set(w[1]).at[2].set(w[1] - w[0])

    w8_spec = pl.BlockSpec((8, IN_FEATURES), lambda i: (0, 0))
    x_spec = pl.BlockSpec((tile_b, IN_FEATURES), lambda i: (i, 0))
    smem_spec = pl.BlockSpec(memory_space=pltpu.MemorySpace.SMEM)

    if labels is None:
        b1 = jnp.asarray([b[1]], jnp.float32)
        score = pl.pallas_call(
            _score_kernel,
            out_shape=jax.ShapeDtypeStruct((1, batch), jnp.float32),
            grid=(num_tiles,),
            in_specs=[smem_spec, w8_spec, x_spec],
            out_specs=pl.BlockSpec((1, tile_b), lambda i: (0, i)),
            compiler_params=pltpu.CompilerParams(
                dimension_semantics=("parallel",),
                vmem_limit_bytes=_VMEM_LIMIT),
        )(b1, w8, x2d)
        # Torch branch returns a detached CPU numpy array.
        return np.asarray(score[0])

    b8 = jnp.zeros((8, 1), jnp.float32)
    b8 = b8.at[0, 0].set(b[0]).at[1, 0].set(b[1]).at[2, 0].set(b[1] - b[0])

    labels_row = labels.astype(jnp.float32).reshape(1, batch)

    kernel = functools.partial(_loss_fa_kernel, tile_b=tile_b,
                               inv_r=1.0 / float(r), n_valid=batch)

    rows, partials = pl.pallas_call(
        kernel,
        out_shape=(
            jax.ShapeDtypeStruct((8, batch), jnp.float32),          # per-row block
            jax.ShapeDtypeStruct((2, num_tiles * 128), jnp.float32),  # per-tile sums
        ),
        grid=(num_tiles,),
        in_specs=[
            w8_spec,                                       # fused weights
            pl.BlockSpec((8, 1), lambda i: (0, 0)),        # fused biases
            x_spec,                                        # x tile
            pl.BlockSpec((1, tile_b), lambda i: (0, i)),   # labels tile
        ],
        out_specs=(
            pl.BlockSpec((8, tile_b), lambda i: (0, i)),   # consolidated rows
            pl.BlockSpec((2, 128), lambda i: (0, i)),      # per-tile partials
        ),
        compiler_params=pltpu.CompilerParams(
            dimension_semantics=("parallel",),             # no carry -> both TCs
            vmem_limit_bytes=_VMEM_LIMIT),
    )(w8, b8, x2d, labels_row)

    # Tiny host-side reduction over per-tile partial sums.
    part = partials.reshape(2, num_tiles, 128)[:, :, 0]    # (2, num_tiles)
    nloss = jnp.sum(part[0]) / batch
    correct = jnp.sum(part[1])

    logits = rows[0:2, :].T                                # (B, 2)
    pred_score = rows[2:4, :].T                            # (B, 2)
    pred_label = rows[4, :]                                # (B,)
    return nloss, logits, pred_score, pred_label, correct


# --------------------------------------------------------------------------
# Pure-JAX reference mirroring the torch code (for verification)
# --------------------------------------------------------------------------
def _reference_forward(x, weight, bias, labels, r=1.0):
    x2d = jnp.squeeze(x, axis=1)
    logits = x2d @ weight.T + bias
    p1 = jax.nn.softmax(logits / r, axis=-1)[:, 1]
    y = labels.astype(jnp.float32)
    log_p = jnp.maximum(jnp.log(p1), -100.0)
    log_1mp = jnp.maximum(jnp.log(1.0 - p1), -100.0)
    nloss = jnp.mean(-(y * log_p + (1.0 - y) * log_1mp))
    pred_score = jax.nn.softmax(logits, axis=-1)
    pred_label = jnp.round(pred_score)[:, 1]
    correct = jnp.sum((pred_label == y).astype(jnp.float32))
    return nloss, logits, pred_score, pred_label, correct


def _check(out, ref):
    nloss, logits, pred_score, pred_label, correct = out
    np.testing.assert_allclose(np.asarray(nloss), np.asarray(ref[0]), rtol=1e-5, atol=1e-5)
    np.testing.assert_allclose(np.asarray(logits), np.asarray(ref[1]), rtol=1e-5, atol=1e-5)
    np.testing.assert_allclose(np.asarray(pred_score), np.asarray(ref[2]), rtol=1e-5, atol=1e-5)
    np.testing.assert_allclose(np.asarray(pred_label), np.asarray(ref[3]), rtol=0, atol=0)
    np.testing.assert_allclose(np.asarray(correct), np.asarray(ref[4]), rtol=0, atol=0)


if __name__ == "__main__":
    key = jax.random.PRNGKey(0)
    k_x, k_w, k_b, k_l, k_x2, k_l2 = jax.random.split(key, 6)

    # Deterministic Linear(128, 2) init in torch layout (out, in).
    bound = 1.0 / np.sqrt(IN_FEATURES)
    weight = jax.random.uniform(k_w, (OUT_FEATURES, IN_FEATURES),
                                minval=-bound, maxval=bound, dtype=jnp.float32)
    bias = jax.random.uniform(k_b, (OUT_FEATURES,),
                              minval=-bound, maxval=bound, dtype=jnp.float32)

    # --- labels branch, small batch (single ragged tile) ---
    B = 8
    x = jax.random.normal(k_x, (B, 1, IN_FEATURES), dtype=jnp.float32)
    labels = jax.random.bernoulli(k_l, 0.5, (B,)).astype(jnp.int32)
    out = loss_fa_forward(x, weight, bias, labels=labels, r=1.0)
    jax.block_until_ready(out)
    _check(out, _reference_forward(x, weight, bias, labels, r=1.0))

    # --- labels branch, multi-tile with ragged last tile (per-tile partials) ---
    B2 = 200
    x2 = jax.random.normal(k_x2, (B2, 1, IN_FEATURES), dtype=jnp.float32)
    labels2 = jax.random.bernoulli(k_l2, 0.5, (B2,)).astype(jnp.int32)
    out2 = loss_fa_forward(x2, weight, bias, labels=labels2, r=2.0, tile_b=128)
    jax.block_until_ready(out2)
    _check(out2, _reference_forward(x2, weight, bias, labels2, r=2.0))

    # --- no-labels branch (slim inference score path) ---
    scores = loss_fa_forward(x, weight, bias, labels=None)
    assert scores.shape == (B,)
    ref_logits = _reference_forward(x, weight, bias, labels, r=1.0)[1]
    np.testing.assert_allclose(scores, np.asarray(ref_logits[:, 1]), rtol=1e-5, atol=1e-5)

    print("KERNEL_OK")
</pallas_src>

<mosaic_0001>
module attributes {stable_mosaic.version = 11 : i64} {
  func.func @_loss_fa_kernel(%arg0: i32, %arg1: memref<8x128xf32, #tpu.memory_space<vmem>>, %arg2: memref<8x1xf32, #tpu.memory_space<vmem>>, %arg3: memref<128x128xf32, #tpu.memory_space<vmem>>, %arg4: memref<1x128xf32, #tpu.memory_space<vmem>>, %arg5: memref<8x128xf32, #tpu.memory_space<vmem>>, %arg6: memref<2x128xf32, #tpu.memory_space<vmem>>) attributes {dimension_semantics = [#tpu.dimension_semantics<parallel>], iteration_bounds = array<i64: 1>, scalar_prefetch = 0 : i64, scratch_operands = 0 : i64, tpu.core_type = #tpu.core_type<tc>, window_params = [{pipeline_mode = #tpu.pipeline_mode<synchronous>, transform_indices = @transform_0, window_bounds = array<i64: 8, 128>}, {pipeline_mode = #tpu.pipeline_mode<synchronous>, transform_indices = @transform_1, window_bounds = array<i64: 8, 1>}, {transform_indices = @transform_2, window_bounds = array<i64: 128, 128>}, {transform_indices = @transform_3, window_bounds = array<i64: 1, 128>}, {transform_indices = @transform_4, window_bounds = array<i64: 8, 128>}, {transform_indices = @transform_5, window_bounds = array<i64: 2, 128>}]} {
    %c0 = arith.constant 0 : index
    %c0_0 = arith.constant 0 : index
    %0 = vector.load %arg1[%c0, %c0_0] : memref<8x128xf32, #tpu.memory_space<vmem>>, vector<8x128xf32>
    %c0_1 = arith.constant 0 : index
    %c0_2 = arith.constant 0 : index
    %1 = vector.load %arg3[%c0_1, %c0_2] : memref<128x128xf32, #tpu.memory_space<vmem>>, vector<128x128xf32>
    %cst = arith.constant dense<0.000000e+00> : vector<8x128xf32>
    %2 = tpu.matmul %0, %1, %cst {dimension_numbers = #tpu.dot_dimension_numbers<[1], [1], [0], [0], [0, 0, 1, 0], [], []>} : vector<8x128xf32>, vector<128x128xf32>, vector<8x128xf32> -> vector<8x128xf32>
    %c0_3 = arith.constant 0 : index
    %c0_4 = arith.constant 0 : index
    %3 = vector.load %arg2[%c0_3, %c0_4] : memref<8x1xf32, #tpu.memory_space<vmem>>, vector<8x1xf32>
    %4 = vector.broadcast %3 : vector<8x1xf32> to vector<8x128xf32>
    %5 = arith.addf %2, %4 : vector<8x128xf32>
    %6 = vector.extract_strided_slice %5 {offsets = [2, 0], sizes = [1, 128], strides = [1, 1]} : vector<8x128xf32> to vector<1x128xf32>
    %cst_5 = arith.constant 1.000000e+00 : f32
    %7 = vector.broadcast %cst_5 : f32 to vector<1x128xf32>
    %8 = arith.mulf %6, %7 : vector<1x128xf32>
    %cst_6 = arith.constant 0.000000e+00 : f32
    %9 = vector.broadcast %cst_6 : f32 to vector<1x128xf32>
    %10 = arith.subf %9, %6 : vector<1x128xf32>
    %11 = math.absf %8 : vector<1x128xf32>
    %cst_7 = arith.constant 0.000000e+00 : f32
    %12 = vector.broadcast %cst_7 : f32 to vector<1x128xf32>
    %13 = arith.subf %12, %11 : vector<1x128xf32>
    %14 = tpu.concatenate %10, %13 in 0 : vector<1x128xf32>, vector<1x128xf32> -> vector<2x128xf32>
    %15 = math.exp %14 : vector<2x128xf32>
    %16 = vector.extract_strided_slice %15 {offsets = [0, 0], sizes = [1, 128], strides = [1, 1]} : vector<2x128xf32> to vector<1x128xf32>
    %cst_8 = arith.constant 1.000000e+00 : f32
    %17 = vector.broadcast %cst_8 : f32 to vector<1x128xf32>
    %18 = arith.addf %17, %16 : vector<1x128xf32>
    %cst_9 = arith.constant 1.000000e+00 : f32
    %19 = vector.broadcast %cst_9 : f32 to vector<1x128xf32>
    %20 = arith.divf %19, %18 : vector<1x128xf32>
    %cst_10 = arith.constant 0.000000e+00 : f32
    %21 = vector.broadcast %cst_10 : f32 to vector<1x128xf32>
    %22 = arith.maximumf %8, %21 : vector<1x128xf32>
    %23 = vector.extract_strided_slice %15 {offsets = [1, 0], sizes = [1, 128], strides = [1, 1]} : vector<2x128xf32> to vector<1x128xf32>
    %cst_11 = arith.constant 1.000000e+00 : f32
    %24 = vector.broadcast %cst_11 : f32 to vector<1x128xf32>
    %25 = arith.addf %24, %23 : vector<1x128xf32>
    %26 = math.log %25 : vector<1x128xf32>
    %27 = arith.addf %22, %26 : vector<1x128xf32>
    %28 = arith.subf %27, %8 : vector<1x128xf32>
    %cst_12 = arith.constant 0.000000e+00 : f32
    %29 = vector.broadcast %cst_12 : f32 to vector<1x128xf32>
    %30 = arith.cmpf ogt, %6, %29 : vector<1x128xf32>
    %31 = arith.extui %30 : vector<1x128xi1> to vector<1x128xi32>
    %32 = arith.sitofp %31 : vector<1x128xi32> to vector<1x128xf32>
    %33 = vector.extract_strided_slice %5 {offsets = [0, 0], sizes = [2, 128], strides = [1, 1]} : vector<8x128xf32> to vector<2x128xf32>
    %c0_13 = arith.constant 0 : index
    %c0_14 = arith.constant 0 : index
    %34 = vector.load %arg5[%c0_13, %c0_14] : memref<8x128xf32, #tpu.memory_space<vmem>>, vector<2x128xf32>
    tpu.vector_store %arg5[%c0_13, %c0_14], %33 {strides = array<i32>} : memref<8x128xf32, #tpu.memory_space<vmem>>, vector<2x128xf32>,
    %cst_15 = arith.constant 1.000000e+00 : f32
    %35 = vector.broadcast %cst_15 : f32 to vector<1x128xf32>
    %36 = arith.subf %35, %20 : vector<1x128xf32>
    %c2 = arith.constant 2 : index
    %c0_16 = arith.constant 0 : index
    %37 = vector.load %arg5[%c2, %c0_16] : memref<8x128xf32, #tpu.memory_space<vmem>>, vector<1x128xf32>
    tpu.vector_store %arg5[%c2, %c0_16], %36 {strides = array<i32>} : memref<8x128xf32, #tpu.memory_space<vmem>>, vector<1x128xf32>,
    %c3 = arith.constant 3 : index
    %c0_17 = arith.constant 0 : index
    %38 = vector.load %arg5[%c3, %c0_17] : memref<8x128xf32, #tpu.memory_space<vmem>>, vector<1x128xf32>
    tpu.vector_store %arg5[%c3, %c0_17], %20 {strides = array<i32>} : memref<8x128xf32, #tpu.memory_space<vmem>>, vector<1x128xf32>,
    %c4 = arith.constant 4 : index
    %c0_18 = arith.constant 0 : index
    %39 = vector.load %arg5[%c4, %c0_18] : memref<8x128xf32, #tpu.memory_space<vmem>>, vector<1x128xf32>
    tpu.vector_store %arg5[%c4, %c0_18], %32 {strides = array<i32>} : memref<8x128xf32, #tpu.memory_space<vmem>>, vector<1x128xf32>,
    %cst_19 = arith.constant 0.000000e+00 : f32
    %40 = vector.broadcast %cst_19 : f32 to vector<3x128xf32>
    %c5 = arith.constant 5 : index
    %c0_20 = arith.constant 0 : index
    %41 = vector.load %arg5[%c5, %c0_20] : memref<8x128xf32, #tpu.memory_space<vmem>>, vector<3x128xf32>
    tpu.vector_store %arg5[%c5, %c0_20], %40 {strides = array<i32>} : memref<8x128xf32, #tpu.memory_space<vmem>>, vector<3x128xf32>,
    %c0_21 = arith.constant 0 : index
    %c0_22 = arith.constant 0 : index
    %42 = vector.load %arg4[%c0_21, %c0_22] : memref<1x128xf32, #tpu.memory_space<vmem>>, vector<1x128xf32>
    %cst_23 = arith.constant 0.000000e+00 : f32
    %43 = vector.broadcast %cst_23 : f32 to vector<1x128xf32>
    %44 = arith.subf %43, %28 : vector<1x128xf32>
    %cst_24 = arith.constant -1.000000e+02 : f32
    %45 = vector.broadcast %cst_24 : f32 to vector<1x128xf32>
    %46 = arith.maximumf %44, %45 : vector<1x128xf32>
    %cst_25 = arith.constant 0.000000e+00 : f32
    %47 = vector.broadcast %cst_25 : f32 to vector<1x128xf32>
    %48 = arith.subf %47, %27 : vector<1x128xf32>
    %cst_26 = arith.constant -1.000000e+02 : f32
    %49 = vector.broadcast %cst_26 : f32 to vector<1x128xf32>
    %50 = arith.maximumf %48, %49 : vector<1x128xf32>
    %51 = arith.mulf %42, %46 : vector<1x128xf32>
    %cst_27 = arith.constant 1.000000e+00 : f32
    %52 = vector.broadcast %cst_27 : f32 to vector<1x128xf32>
    %53 = arith.subf %52, %42 : vector<1x128xf32>
    %54 = arith.mulf %53, %50 : vector<1x128xf32>
    %55 = arith.addf %51, %54 : vector<1x128xf32>
    %cst_28 = arith.constant 0.000000e+00 : f32
    %56 = vector.broadcast %cst_28 : f32 to vector<1x128xf32>
    %57 = arith.subf %56, %55 : vector<1x128xf32>
    %58 = tpu.iota {dimensions = array<i32: 1>} : vector<1x128xi32>
    %c128_i32 = arith.constant 128 : i32
    %59 = arith.muli %arg0, %c128_i32 : i32
    %60 = vector.broadcast %59 : i32 to vector<1x128xi32>
    %61 = arith.addi %58, %60 : vector<1x128xi32>
    %c8_i32 = arith.constant 8 : i32
    %62 = vector.broadcast %c8_i32 : i32 to vector<1x128xi32>
    %63 = arith.cmpi slt, %61, %62 : vector<1x128xi32>
    %64 = arith.cmpf oeq, %32, %42 : vector<1x128xf32>
    %65 = arith.extui %64 : vector<1x128xi1> to vector<1x128xi32>
    %66 = arith.sitofp %65 : vector<1x128xi32> to vector<1x128xf32>
    %cst_29 = arith.constant 0.000000e+00 : f32
    %67 = vector.broadcast %cst_29 : f32 to vector<1x128xf32>
    %68 = arith.select %63, %57, %67 : vector<1x128xi1>, vector<1x128xf32>
    %cst_30 = arith.constant dense<0.000000e+00> : vector<1xf32>
    %69 = vector.multi_reduction <add>, %68, %cst_30 [1] : vector<1x128xf32> to vector<1xf32>
    %70 = vector.shape_cast %69 : vector<1xf32> to vector<1x1xf32>
    %cst_31 = arith.constant 0.000000e+00 : f32
    %71 = vector.broadcast %cst_31 : f32 to vector<1x128xf32>
    %72 = arith.select %63, %66, %71 : vector<1x128xi1>, vector<1x128xf32>
    %cst_32 = arith.constant dense<0.000000e+00> : vector<1xf32>
    %73 = vector.multi_reduction <add>, %72, %cst_32 [1] : vector<1x128xf32> to vector<1xf32>
    %74 = vector.shape_cast %73 : vector<1xf32> to vector<1x1xf32>
    %75 = tpu.concatenate %70, %74 in 0 : vector<1x1xf32>, vector<1x1xf32> -> vector<2x1xf32>
    %76 = vector.shape_cast %75 : vector<2x1xf32> to vector<2x1xf32>
    %77 = vector.broadcast %76 : vector<2x1xf32> to vector<2x128xf32>
    %c0_33 = arith.constant 0 : index
    %c0_34 = arith.constant 0 : index
    %78 = vector.load %arg6[%c0_33, %c0_34] : memref<2x128xf32, #tpu.memory_space<vmem>>, vector<2x128xf32>
    tpu.vector_store %arg6[%c0_33, %c0_34], %77 {strides = array<i32>} : memref<2x128xf32, #tpu.memory_space<vmem>>, vector<2x128xf32>,
    return
  }
  func.func @transform_0(%arg0: i32) -> (i32, i32) {
    %c0_i32 = arith.constant 0 : i32
    %c0_i32_0 = arith.constant 0 : i32
    %c0_i32_1 = arith.constant 0 : i32
    return %c0_i32, %c0_i32_0 : i32, i32
  }
  func.func @transform_1(%arg0: i32) -> (i32, i32) {
    %c0_i32 = arith.constant 0 : i32
    %c0_i32_0 = arith.constant 0 : i32
    %c0_i32_1 = arith.constant 0 : i32
    return %c0_i32, %c0_i32_0 : i32, i32
  }
  func.func @transform_2(%arg0: i32) -> (i32, i32) {
    %c0_i32 = arith.constant 0 : i32
    %c0_i32_0 = arith.constant 0 : i32
    return %arg0, %c0_i32 : i32, i32
  }
  func.func @transform_3(%arg0: i32) -> (i32, i32) {
    %c0_i32 = arith.constant 0 : i32
    %c0_i32_0 = arith.constant 0 : i32
    return %c0_i32, %arg0 : i32, i32
  }
  func.func @transform_4(%arg0: i32) -> (i32, i32) {
    %c0_i32 = arith.constant 0 : i32
    %c0_i32_0 = arith.constant 0 : i32
    return %c0_i32, %arg0 : i32, i32
  }
  func.func @transform_5(%arg0: i32) -> (i32, i32) {
    %c0_i32 = arith.constant 0 : i32
    %c0_i32_0 = arith.constant 0 : i32
    return %c0_i32, %arg0 : i32, i32
  }
}

</mosaic_0001>

<llo_original>
// kernel: tpu_custom_call.1
$region0: #{tpu_custom_call.1}
  #allocation0 [shape = 'u32[]', space=smem, size = 0x4, offset = 0x4, fixed_abs, tag = 'smem constant byte address 0x4 - core index']
  #allocation1 [shape = 'u32[72,128]{1,0:T(1,128)}', space=vmem, size = 0x9000, scoped, tag = 'internal scratch']
  %s0 = inlined_call_operand.vmem [shape: f32[8,128], index: 0, kind: input, shape index: {}]
  %s1 = inlined_call_operand.vmem [shape: f32[8,1], index: 1, kind: input, shape index: {}]
  %s2 = inlined_call_operand.hbm [shape: f32[8,128], index: 2, kind: input, shape index: {}]
  %s3 = inlined_call_operand.vmem [shape: f32[1,8], index: 3, kind: input, shape index: {}]
  %s4 = inlined_call_operand.hbm [shape: f32[8,8], index: 4, kind: output, shape index: {0}]
  %s5 = inlined_call_operand.hbm [shape: f32[2,128], index: 5, kind: output, shape index: {1}]
  %6 = xla_tuple %s4, %s5
  %s7 = sld [smem:[#allocation0]]
  $region38: #{tpu_custom_call.1} parent=0
    _
  %s9 = ssub.s32 1, %s7
  %s10 = scalar_select 0, %s9, %s7
  $region1: #{tpu_custom_call.1} parent=0
    #allocation2 [shape = 'u8[65536]{0}', space=vmem, size = 0x10000, scoped, tag = 'input window, operand 2, single buffered']
    #allocation3 [shape = 's32[1]{0}', space=sflag, size = 0x4, scoped, tag = 'scoped memory for tpu_custom_call.1']
    #allocation4 [shape = 's32[1]{0}', space=sflag, size = 0x4, scoped, tag = 'scoped memory for tpu_custom_call.1']
    #allocation5 [shape = 'u8[4096]{0}', space=vmem, size = 0x1000, scoped, tag = 'output window, operand 0, single buffered']
    #allocation6 [shape = 'u8[1024]{0}', space=vmem, size = 0x400, scoped, tag = 'output window, operand 1, single buffered']
    #allocation7 [shape = 's32[1]{0}', space=sflag, size = 0x4, scoped, tag = 'scoped memory for tpu_custom_call.1']
    %11 = vsyncpa [#allocation3], 0
    %12 = vsyncpa [#allocation4], 0
    %13 = vsyncpa [#allocation7], 0
    // Predicated region
    $region2: #{tpu_custom_call.1} parent=1 // pred_check
      _
    $region3: #{tpu_custom_call.1} parent=1 // pred_check_branch
      %15 = sbr.rel (0) target = $region5
    $region4: #{tpu_custom_call.1} parent=1 // pred_region
      _
    $region5: #{tpu_custom_call.1} parent=1 // pred_fallthru
      _
    // Predicated region
    $region6: #{tpu_custom_call.1} parent=1 // pred_check
      _
    $region7: #{tpu_custom_call.1} parent=1 // pred_check_branch
      %17 = sbr.rel (0) target = $region9
    $region8: #{tpu_custom_call.1} parent=1 // pred_region
      _
    $region9: #{tpu_custom_call.1} parent=1 // pred_fallthru
      _
    // Predicated region
    $region10: #{tpu_custom_call.1} parent=1 // pred_check
      _
    $region11: #{tpu_custom_call.1} parent=1 // pred_check_branch
      %19 = sbr.rel (0) target = $region13
    $region12: #{tpu_custom_call.1} parent=1 // pred_region
      %21 = vsyncadd [#allocation3], 1920
      %s22 = sshll.u32 %s2, 4
      %s23 = int_to_ptr.hbm [resolvable:$true] %s22
      %s24 = sshll.u32 [#allocation2], 4
      %s25 = int_to_ptr.vmem [resolvable:$true] %s24
      %30 = dma.hbm_to_vmem [thread:$0]  %s23, 128, %s25, [#allocation3], 128, 128, 8
    $region13: #{tpu_custom_call.1} parent=1 // pred_fallthru
      _
    // Predicated region
    $region14: #{tpu_custom_call.1} parent=1 // pred_check
      _
    $region15: #{tpu_custom_call.1} parent=1 // pred_check_branch
      %32 = sbr.rel (0) target = $region17
    $region16: #{tpu_custom_call.1} parent=1 // pred_region
      _
    $region17: #{tpu_custom_call.1} parent=1 // pred_fallthru
      _
    // Predicated region
    $region18: #{tpu_custom_call.1} parent=1 // pred_check
      _
    $region19: #{tpu_custom_call.1} parent=1 // pred_check_branch
      %34 = sbr.rel (0) target = $region21
    $region20: #{tpu_custom_call.1} parent=1 // pred_region
      %36 = dma.done [#allocation3], 2048
    $region21: #{tpu_custom_call.1} parent=1 // pred_fallthru
      _
    %v37 = vld [vmem:[%s0] sm:$0xff]
    %v38 = vld [vmem:[#allocation2] sm:$0xff]
    %v39 = vld [vmem:[#allocation2 + $0x8] sm:$0xff]
    %v40 = vld [vmem:[#allocation2 + $0x10] sm:$0xff]
    %v41 = vld [vmem:[#allocation2 + $0x18] sm:$0xff]
    %v42 = vld [vmem:[#allocation2 + $0x20] sm:$0xff]
    %v43 = vld [vmem:[#allocation2 + $0x28] sm:$0xff]
    %v44 = vld [vmem:[#allocation2 + $0x30] sm:$0xff]
    %v45 = vld [vmem:[#allocation2 + $0x38] sm:$0xff]
    %v46 = vld [vmem:[#allocation2 + $0x40] sm:$0xff]
    %v47 = vld [vmem:[#allocation2 + $0x48] sm:$0xff]
    %v48 = vld [vmem:[#allocation2 + $0x50] sm:$0xff]
    %v49 = vld [vmem:[#allocation2 + $0x58] sm:$0xff]
    %v50 = vld [vmem:[#allocation2 + $0x60] sm:$0xff]
    %v51 = vld [vmem:[#allocation2 + $0x68] sm:$0xff]
    %v52 = vld [vmem:[#allocation2 + $0x70] sm:$0xff]
    %v53 = vld [vmem:[#allocation2 + $0x78] sm:$0xff]
    %v54 = vld [vmem:[%s1] sm:$0xff]
    %56 = vset.pattern.permute.xlu0 0
    %57 = vperm.xlu0 %56, %v54
    %v58 = vpop.permute.xlu0 %57
    %60 = vmatpush.xpose.msra.mxu0 %v53
    %61 = vmatpush.xpose.msra.mxu0 %v52
    %62 = vmatpush.xpose.msra.mxu0 %v51
    %63 = vmatpush.xpose.msra.mxu0 %v50
    %64 = vmatpush.xpose.msra.mxu0 %v49
    %65 = vmatpush.xpose.msra.mxu0 %v48
    %66 = vmatpush.xpose.msra.mxu0 %v47
    %67 = vmatpush.xpose.msra.mxu0 %v46
    %68 = vmatpush.xpose.msra.mxu0 %v45
    %69 = vmatpush.xpose.msra.mxu0 %v44
    %70 = vmatpush.xpose.msra.mxu0 %v43
    %71 = vmatpush.xpose.msra.mxu0 %v42
    %72 = vmatpush.xpose.msra.mxu0 %v41
    %73 = vmatpush.xpose.msra.mxu0 %v40
    %74 = vmatpush.xpose.msra.mxu0 %v39
    %75 = vmatpush.xpose.msra.mxu0 %v38
    %76 = vmatmul.f32.gmra.mxu0 %v37
    %v77 = vpop.f32.mrf.mxu0
    %v78 = vadd.f32 %v58, %v77
    %79 = vdwg.mxu0
    %v80 = vsub.f32 0.0, %v78
    %v81 = vand.u32 2147483647, %v78
    %v82 = vsub.f32 0.0, %v81
    %v84 = vrot.slane %v80, 2
    %v87 = vrot.slane %v82, 1
    %vm89 = vcmask 1040384
    %v90 = vsel %vm89, %v84, %v87
    %v91 = vmul.f32 %v90, 1.442695
    %v92 = vpow.pop %v91
    %v93 = vadd.f32 %v92, 1.0
    %v94 = vrcp.pop %v93
    %v95 = vmul.f32 %v93, %v94
    %v96 = vsub.f32 1.0, %v95
    %v97 = vmul.f32 %v94, %v96
    %v98 = vadd.f32 %v94, %v97
    %vm99 = vweird.f32 %v93
    %vm100 = vweird.f32 %v94
    %vm101 = vmor %vm99, %vm100
    %v102 = vsel %vm101, %v94, %v98
    %v103 = vand.u32 2147483647, %v93
    %vm104 = vcmp.eq.f32.partialorder %v103, 8.507059e+37
    %v105 = vand.u32 %v93, 2147483648
    %v106 = vor.u32 1.1754944e-38, %v105
    %v107 = vsel %vm104, %v106, %v102
    %v108 = vmul.f32 1.0, %v107
    %v109 = vmax.f32 %v78, 0.0
    %v110 = vlog2.pop %v93
    %v111 = vmul.f32 %v110, 0.6931472
    %v113 = vrot.slane %v111, 7
    %v115 = vadd.f32 %v109, %v113
    %v116 = vsub.f32 %v115, %v78
    %vm117 = vcmp.gt.f32.partialorder %v78, 0.0
    %v118 = vsel %vm117, 1, 0
    %v119 = vcvt.s32.f32 %v118
    %120 = vst [vmem:[#allocation5] sm:$0x3] %v78
    %v121 = vsub.f32 1.0, %v108
    %122 = vst [vmem:[#allocation5 + $0x2] sm:$0x1] %v121
    %123 = vst [vmem:[#allocation5 + $0x3] sm:$0x1] %v108
    %124 = vst [vmem:[#allocation5 + $0x2] sm:$0x4] %v119
    %125 = vst [vmem:[#allocation5 + $0x5] sm:$0x7] 0.0
    %v126 = vld [vmem:[%s3] sm:$0x1]
    %v127 = vsub.f32 0.0, %v116
    %v128 = vmax.f32 %v127, -100.0
    %v129 = vsub.f32 0.0, %v115
    %v130 = vmax.f32 %v129, -100.0
    %132 = vst [vmem:[#allocation1] sm:$0xff] %v128
    %s133 = scalar_lea.vmem [#allocation1], 2
    %v134 = vld [vmem:[%s133] ss:$9 sm:$0xff]
    %v136 = vmul.f32 %v126, %v134
    %v137 = vsub.f32 1.0, %v126
    %139 = vst [vmem:[#allocation1] sm:$0xff] %v130
    %s140 = scalar_lea.vmem [#allocation1], 2
    %v141 = vld [vmem:[%s140] ss:$9 sm:$0xff]
    %v143 = vmul.f32 %v137, %v141
    %v144 = vadd.f32 %v136, %v143
    %v145 = vsub.f32 0.0, %v144
    %v146 = vlaneseq
    %v147 = vand.u32 %v146, 127
    %s148 = smul.u32 0, 128
    %v149 = vstv %s148
    %v150 = vadd.s32 %v147, %v149
    %vm151 = vcmp.lt.s32.totalorder %v150, 8
    %v153 = vperm.slane %v126, 0
    %vm155 = vcmp.eq.f32.partialorder %v119, %v153
    %v156 = vsel %vm155, 1, 0
    %v157 = vcvt.s32.f32 %v156
    %v158 = vsel %vm151, %v145, 0.0
    %v159 = vsel %vm89, %v158, 0.0
    %160 = vadd.xlane.f32.xlu0 %v159
    %v161 = vpop.xlane.xlu0 %160
    %v162 = vsel %vm151, %v157, 0.0
    %vm163 = vcmask 1042434
    %v164 = vsel %vm163, %v162, 0.0
    %165 = vadd.xlane.f32.xlu0 %v164
    %v166 = vpop.xlane.xlu0 %165
    %v168 = vrot.slane %v166, 1
    %v170 = vsel %vm89, %v161, %v168
    %172 = vset.pattern.permute.xlu0 0
    %173 = vperm.xlu0 %172, %v170
    %v174 = vpop.permute.xlu0 %173
    %176 = vst [vmem:[#allocation6] sm:$0x3] %v174
    // Predicated region
    $region22: #{tpu_custom_call.1} parent=1 // pred_check
      _
    $region23: #{tpu_custom_call.1} parent=1 // pred_check_branch
      %178 = sbr.rel (0) target = $region25
    $region24: #{tpu_custom_call.1} parent=1 // pred_region
      %180 = vsyncadd [#allocation4], 0
      %s182 = sshll.u32 [#allocation5], 4
      %s183 = int_to_ptr.vmem [resolvable:$true] %s182
      %s184 = sshll.u32 %s4, 4
      %s185 = int_to_ptr.hbm [resolvable:$true] %s184
      %187 = dma.vmem_to_hbm [thread:$0]  %s183, 128, %s185, [#allocation4]
    $region25: #{tpu_custom_call.1} parent=1 // pred_fallthru
      _
    // Predicated region
    $region26: #{tpu_custom_call.1} parent=1 // pred_check
      _
    $region27: #{tpu_custom_call.1} parent=1 // pred_check_branch
      %189 = sbr.rel (0) target = $region29
    $region28: #{tpu_custom_call.1} parent=1 // pred_region
      %191 = vsyncadd [#allocation7], 0
      %s193 = sshll.u32 [#allocation6], 4
      %s194 = int_to_ptr.vmem [resolvable:$true] %s193
      %s195 = sshll.u32 %s5, 4
      %s196 = int_to_ptr.hbm [resolvable:$true] %s195
      %198 = dma.vmem_to_hbm [thread:$0]  %s194, 32, %s196, [#allocation7]
    $region29: #{tpu_custom_call.1} parent=1 // pred_fallthru
      _
    // Predicated region
    $region30: #{tpu_custom_call.1} parent=1 // pred_check
      _
    $region31: #{tpu_custom_call.1} parent=1 // pred_check_branch
      %200 = sbr.rel (0) target = $region33
    $region32: #{tpu_custom_call.1} parent=1 // pred_region
      %202 = dma.done [#allocation4], 128
    $region33: #{tpu_custom_call.1} parent=1 // pred_fallthru
      _
    // Predicated region
    $region34: #{tpu_custom_call.1} parent=1 // pred_check
      _
    $region35: #{tpu_custom_call.1} parent=1 // pred_check_branch
      %204 = sbr.rel (0) target = $region37
    $region36: #{tpu_custom_call.1} parent=1 // pred_region
      %206 = dma.done [#allocation7], 32
    $region37: #{tpu_custom_call.1} parent=1 // pred_fallthru
      _
    %207 = vsyncpa [#allocation3], 1
    %208 = vsyncpa [#allocation4], 1
    %209 = vsyncpa [#allocation7], 1

</llo_original>
